<compile_context>
chip_gen: v6e
topology: v6e:2x2x1
jax: 0.10.0
libtpu: 0.0.40
codegen_flags: <defaults>
</compile_context>

<pallas_src>
import functools

import jax
import jax.numpy as jnp
import numpy as np
from jax import lax
from jax.experimental import pallas as pl
from jax.experimental.pallas import tpu as pltpu

_INV_SQRT2 = 0.7071067811865476
_LANE = 128


def _btl_kernel(real_ref, fake_ref, ml_ref, lat_ref, out_ref, acc_ref, *,
                n_rows, triplet_margin):
    """Grid = (num_cores, n_steps); core axis 'parallel', step axis 'arbitrary'.

    Each (core, step) processes one (tile_rows, 128) tile of the flattened
    real/fake images and accumulates per-lane partial BCE sums into `acc_ref`.
    The tiny KL / bayesian-triplet / percentage math runs once per core at the
    final step; per-core scalars are packed into the (1, 8, 128) output block:
        sublane 0: partial BCE sum   sublane 1: KL
        sublane 2: triplet NLL       sublane 3: triplet percentage
    """
    step = pl.program_id(1)
    n_steps = pl.num_programs(1)
    logical_tile = pl.program_id(0) * n_steps + step
    tile_rows = real_ref.shape[0]

    @pl.when(step == 0)
    def _init():
        acc_ref[...] = jnp.zeros_like(acc_ref)

    # ---- partial binary-cross-entropy sum for this tile (cast after load) ----
    y = real_ref[...].astype(jnp.float32)
    x = fake_ref[...].astype(jnp.float32)
    log_x = jnp.maximum(jnp.log(x), -100.0)          # torch BCE clamps log at -100
    log_1mx = jnp.maximum(jnp.log(1.0 - x), -100.0)
    bce = -(y * log_x + (1.0 - y) * log_1mx)
    # Mask rows past the real array: covers Pallas tail-block padding and the
    # duplicated (index-clamped) surplus tile of the second core.
    row_ids = logical_tile * tile_rows + lax.broadcasted_iota(jnp.int32, bce.shape, 0)
    bce = jnp.where(row_ids < n_rows, bce, 0.0)
    acc_ref[...] += jnp.sum(bce, axis=0, keepdims=True)   # per-lane partial sums

    # ---- finalize once per core (tiny latent math + pack outputs) ----
    @pl.when(step == n_steps - 1)
    def _finalize():
        bce_partial = jnp.sum(acc_ref[...])

        ml = ml_ref[...].astype(jnp.float32)               # (2, B, D)
        m, lv = ml[0], ml[1]
        kl = -0.5 * jnp.mean(1.0 + lv - m * m - jnp.exp(lv))

        lat = lat_ref[...].astype(jnp.float32)             # (6, N, D)
        muA, lvA = lat[0], lat[1]
        muP, lvP = lat[2], lat[3]
        muN, lvN = lat[4], lat[5]
        varA, varP, varN = jnp.exp(lvA), jnp.exp(lvP), jnp.exp(lvN)

        muA2, muP2, muN2 = muA * muA, muP * muP, muN * muN
        varP2, varN2 = varP * varP, varN * varN

        mu = jnp.sum(muP2 + varP - muN2 - varN - 2.0 * muA * (muP - muN),
                     axis=1, keepdims=True)
        T1 = (varP2 + 2.0 * muP2 * varP + 2.0 * (varA + muA2) * (varP + muP2)
              - 2.0 * muA2 * muP2 - 4.0 * muA * muP * varP)
        T2 = (varN2 + 2.0 * muN2 * varN + 2.0 * (varA + muA2) * (varN + muN2)
              - 2.0 * muA2 * muN2 - 4.0 * muA * muN * varN)
        T3 = 4.0 * muP * muN * varA
        sigma2 = jnp.sum(2.0 * T1 + 2.0 * T2 - 2.0 * T3, axis=1, keepdims=True)
        sigma = jnp.sqrt(jnp.maximum(sigma2, 0.0))         # clamp fp cancellation

        # Normal(mu, sigma + 1e-8).cdf(-margin); exact divide (runs once, tiny)
        z = (-triplet_margin - mu) / (sigma + 1e-8)
        probs = 0.5 * (1.0 + lax.erf(z * _INV_SQRT2))
        trip = jnp.mean(-jnp.log(probs + 1e-8))

        # triplet percentage: squared-distance compare (sqrt is monotone)
        d2AP = jnp.sum((muA - muP) ** 2, axis=1, keepdims=True)
        d2AN = jnp.sum((muA - muN) ** 2, axis=1, keepdims=True)
        num_closer = jnp.sum((d2AP < d2AN).astype(jnp.float32))
        pct = num_closer / muA.shape[0]

        sub = lax.broadcasted_iota(jnp.int32, out_ref.shape, 1)
        res = jnp.where(sub == 0, bce_partial, 0.0)
        res = jnp.where(sub == 1, kl, res)
        res = jnp.where(sub == 2, trip, res)
        res = jnp.where(sub == 3, pct, res)
        out_ref[...] = res


def bayesian_triplet_loss_forward(real_data, fake_data, mean, logvar,
                                  triplet_data,
                                  *, triplet_margin=1.0, recon_beta=1.0,
                                  kl_beta=1.0, triplet_beta=1.0,
                                  tile_rows=4096, num_cores=2):
    """Pallas port of BayesianTripletLoss.forward (bayesian, unmasked, bce)."""
    (muA, logvarA), (muP, logvarP), (muN, logvarN), _attr_idx = triplet_data

    # Stack the small latent tensors -> 2 DMAs instead of 8; native dtype kept
    # (the kernel casts to f32 after the load).
    lat = jnp.stack([muA, logvarA, muP, logvarP, muN, logvarN], axis=0)  # (6,N,D)
    ml = jnp.stack([mean, logvar], axis=0)                               # (2,B,D)

    # Flatten images to (rows, 128).  Only pad (with BCE-neutral values: target
    # 1, prediction 1 -> exactly-zero contribution) when the pixel count is not
    # already a multiple of 8*128; the reshape itself is free.
    n_pixels = real_data.size
    pad_unit = 8 * _LANE
    padded = pl.cdiv(n_pixels, pad_unit) * pad_unit
    real_flat = real_data.reshape(-1)
    fake_flat = fake_data.reshape(-1)
    if padded != n_pixels:
        pad = padded - n_pixels
        real_flat = jnp.pad(real_flat, (0, pad), constant_values=1.0)
        fake_flat = jnp.pad(fake_flat, (0, pad), constant_values=1.0)
    n_rows = padded // _LANE
    real2d = real_flat.reshape(n_rows, _LANE)
    fake2d = fake_flat.reshape(n_rows, _LANE)

    # Tile budget: tr=4096 f32 -> 2 MiB/tile/input, 8 MiB double-buffered total,
    # safely under the default scoped VMEM on v5e/v6e/v7x (16/32/32 MiB).
    tr = min(tile_rows, n_rows)            # n_rows is a multiple of 8, so tr is too
    n_tiles = pl.cdiv(n_rows, tr)
    n_steps = pl.cdiv(n_tiles, num_cores)

    def img_index_map(c, s):
        # Clamp so a core's surplus tile never DMAs out of bounds; its rows are
        # masked to zero inside the kernel.
        return (jnp.minimum(c * n_steps + s, n_tiles - 1), 0)

    kernel = functools.partial(_btl_kernel, n_rows=n_rows,
                               triplet_margin=float(triplet_margin))

    img_bytes = (real2d.size * real2d.dtype.itemsize
                 + fake2d.size * fake2d.dtype.itemsize)
    small_bytes = lat.size * lat.dtype.itemsize + ml.size * ml.dtype.itemsize
    cost = pl.CostEstimate(
        flops=int(7 * padded + 60 * lat.shape[1] * lat.shape[2]),
        transcendentals=int(2 * padded + 4 * lat.shape[1] * lat.shape[2]),
        bytes_accessed=int(img_bytes + small_bytes + num_cores * 8 * _LANE * 4))

    outs = pl.pallas_call(
        kernel,
        out_shape=jax.ShapeDtypeStruct((num_cores, 8, _LANE), jnp.float32),
        grid_spec=pltpu.PrefetchScalarGridSpec(
            num_scalar_prefetch=0,
            grid=(num_cores, n_steps),
            in_specs=[
                pl.BlockSpec((tr, _LANE), img_index_map),
                pl.BlockSpec((tr, _LANE), img_index_map),
                pl.BlockSpec(ml.shape, lambda c, s: (0, 0, 0)),
                pl.BlockSpec(lat.shape, lambda c, s: (0, 0, 0)),
            ],
            out_specs=pl.BlockSpec((1, 8, _LANE), lambda c, s: (c, 0, 0)),
            scratch_shapes=[pltpu.VMEM((1, _LANE), jnp.float32)],
        ),
        compiler_params=pltpu.CompilerParams(
            dimension_semantics=("parallel", "arbitrary")),
        cost_estimate=cost,
    )(real2d, fake2d, ml, lat)

    vals = outs[:, :, 0]                          # (num_cores, 8)
    recon = jnp.sum(vals[:, 0]) / n_pixels        # combine per-core partial sums
    kl = vals[0, 1]
    trip = vals[0, 2]
    pct = vals[0, 3]
    loss = recon_beta * recon + kl_beta * kl + triplet_beta * trip
    return {
        "loss": loss,
        "triplet_loss": trip,
        "recon_loss": recon,
        "kl_divergence_loss": kl,
        "triplet_percentage": jnp.reshape(pct, (1,)),  # matches torch.Tensor([...])
    }


# ---------------- pure-JAX reference (mirrors the PyTorch math) ----------------
def _reference_forward(real_data, fake_data, mean, logvar, triplet_data,
                       triplet_margin=1.0):
    (muA, lvA), (muP, lvP), (muN, lvN), _ = triplet_data
    y = real_data.reshape(-1)
    x = fake_data.reshape(-1)
    recon = jnp.mean(-(y * jnp.maximum(jnp.log(x), -100.0)
                       + (1.0 - y) * jnp.maximum(jnp.log(1.0 - x), -100.0)))
    kl = -0.5 * jnp.mean(1.0 + logvar - mean ** 2 - jnp.exp(logvar))

    varA, varP, varN = jnp.exp(lvA), jnp.exp(lvP), jnp.exp(lvN)
    muA2, muP2, muN2 = muA ** 2, muP ** 2, muN ** 2
    varP2, varN2 = varP ** 2, varN ** 2
    mu = jnp.sum(muP2 + varP - muN2 - varN - 2 * muA * (muP - muN), axis=1)
    T1 = varP2 + 2 * muP2 * varP + 2 * (varA + muA2) * (varP + muP2) \
        - 2 * muA2 * muP2 - 4 * muA * muP * varP
    T2 = varN2 + 2 * muN2 * varN + 2 * (varA + muA2) * (varN + muN2) \
        - 2 * muA2 * muN2 - 4 * muA * muN * varN
    T3 = 4 * muP * muN * varA
    sigma = jnp.sqrt(jnp.sum(2 * T1 + 2 * T2 - 2 * T3, axis=1))
    z = (-triplet_margin - mu) / (sigma + 1e-8)
    probs = 0.5 * (1.0 + lax.erf(z * _INV_SQRT2))
    trip = jnp.mean(-jnp.log(probs + 1e-8))

    dAP = jnp.linalg.norm(muA - muP, axis=-1)
    dAN = jnp.linalg.norm(muA - muN, axis=-1)
    pct = jnp.sum((dAP < dAN).astype(jnp.int32)).astype(jnp.float32) / muA.shape[0]
    loss = recon + kl + trip
    return loss, trip, recon, kl, pct


if __name__ == "__main__":
    key = jax.random.PRNGKey(0)
    kr, kf, km, kl_, k1, k2, k3, k4, k5, k6 = jax.random.split(key, 10)

    B, C, H, W = 2, 4, 16, 16     # image / reconstruction batch (NCHW)
    N, D = 8, 32                  # triplet batch, latent dim

    real_data = jax.random.uniform(kr, (B, C, H, W), jnp.float32, 1e-3, 1.0 - 1e-3)
    fake_data = jax.nn.sigmoid(jax.random.normal(kf, (B, C, H, W), jnp.float32))
    mean = jax.random.normal(km, (B, D), jnp.float32)
    logvar = 0.1 * jax.random.normal(kl_, (B, D), jnp.float32)

    muA = jax.random.normal(k1, (N, D), jnp.float32)
    lvA = 0.1 * jax.random.normal(k2, (N, D), jnp.float32) - 1.0
    muP = muA + 0.1 * jax.random.normal(k3, (N, D), jnp.float32)
    lvP = 0.1 * jax.random.normal(k4, (N, D), jnp.float32) - 1.0
    muN = jax.random.normal(k5, (N, D), jnp.float32)
    lvN = 0.1 * jax.random.normal(k6, (N, D), jnp.float32) - 1.0
    attribute_index = -1  # unmasked path (attributes=[] config)
    triplet_data = ((muA, lvA), (muP, lvP), (muN, lvN), attribute_index)

    out = bayesian_triplet_loss_forward(real_data, fake_data, mean, logvar,
                                        triplet_data)
    jax.block_until_ready(out)

    ref_loss, ref_trip, ref_recon, ref_kl, ref_pct = _reference_forward(
        real_data, fake_data, mean, logvar, triplet_data)

    np.testing.assert_allclose(np.asarray(out["recon_loss"]), np.asarray(ref_recon),
                               rtol=1e-4, atol=1e-6)
    np.testing.assert_allclose(np.asarray(out["kl_divergence_loss"]), np.asarray(ref_kl),
                               rtol=1e-4, atol=1e-6)
    np.testing.assert_allclose(np.asarray(out["triplet_loss"]), np.asarray(ref_trip),
                               rtol=1e-3, atol=1e-5)
    np.testing.assert_allclose(np.asarray(out["loss"]), np.asarray(ref_loss),
                               rtol=1e-3, atol=1e-5)
    np.testing.assert_allclose(np.asarray(out["triplet_percentage"])[0],
                               np.asarray(ref_pct), rtol=1e-6, atol=1e-6)

    print("KERNEL_OK")
</pallas_src>

<mosaic_0001>
module attributes {stable_mosaic.version = 11 : i64} {
  func.func @_btl_kernel(%arg0: i32, %arg1: i32, %arg2: memref<16x128xf32, #tpu.memory_space<vmem>>, %arg3: memref<16x128xf32, #tpu.memory_space<vmem>>, %arg4: memref<2x2x32xf32, #tpu.memory_space<vmem>>, %arg5: memref<6x8x32xf32, #tpu.memory_space<vmem>>, %arg6: memref<1x8x128xf32, #tpu.memory_space<vmem>>, %arg7: memref<1x128xf32, #tpu.memory_space<vmem>>) attributes {dimension_semantics = [#tpu.dimension_semantics<parallel>, #tpu.dimension_semantics<arbitrary>], iteration_bounds = array<i64: 2, 1>, scalar_prefetch = 0 : i64, scratch_operands = 1 : i64, tpu.core_type = #tpu.core_type<tc>, window_params = [{transform_indices = @transform_0, window_bounds = array<i64: 16, 128>}, {transform_indices = @transform_1, window_bounds = array<i64: 16, 128>}, {pipeline_mode = #tpu.pipeline_mode<synchronous>, transform_indices = @transform_2, window_bounds = array<i64: 2, 2, 32>}, {pipeline_mode = #tpu.pipeline_mode<synchronous>, transform_indices = @transform_3, window_bounds = array<i64: 6, 8, 32>}, {transform_indices = @transform_4, window_bounds = array<i64: 1, 8, 128>}]} {
    %c1_i32 = arith.constant 1 : i32
    %0 = arith.muli %arg0, %c1_i32 : i32
    %1 = arith.addi %0, %arg1 : i32
    %c0_i32 = arith.constant 0 : i32
    %2 = arith.cmpi eq, %arg1, %c0_i32 : i32
    %3 = arith.extui %2 : i1 to i32
    %c0_i32_0 = arith.constant 0 : i32
    %4 = arith.cmpi ne, %3, %c0_i32_0 : i32
    scf.if %4 {
      %cst_17 = arith.constant 0.000000e+00 : f32
      %38 = vector.broadcast %cst_17 : f32 to vector<1x128xf32>
      %c0_18 = arith.constant 0 : index
      %c0_19 = arith.constant 0 : index
      %39 = vector.load %arg7[%c0_18, %c0_19] : memref<1x128xf32, #tpu.memory_space<vmem>>, vector<1x128xf32>
      tpu.vector_store %arg7[%c0_18, %c0_19], %38 {strides = array<i32>} : memref<1x128xf32, #tpu.memory_space<vmem>>, vector<1x128xf32>,
    } else {
    }
    %c0 = arith.constant 0 : index
    %c0_1 = arith.constant 0 : index
    %5 = vector.load %arg2[%c0, %c0_1] : memref<16x128xf32, #tpu.memory_space<vmem>>, vector<16x128xf32>
    %c0_2 = arith.constant 0 : index
    %c0_3 = arith.constant 0 : index
    %6 = vector.load %arg3[%c0_2, %c0_3] : memref<16x128xf32, #tpu.memory_space<vmem>>, vector<16x128xf32>
    %7 = math.log %6 : vector<16x128xf32>
    %cst = arith.constant -1.000000e+02 : f32
    %8 = vector.broadcast %cst : f32 to vector<16x128xf32>
    %9 = arith.maximumf %7, %8 : vector<16x128xf32>
    %cst_4 = arith.constant 1.000000e+00 : f32
    %10 = vector.broadcast %cst_4 : f32 to vector<16x128xf32>
    %11 = arith.subf %10, %6 : vector<16x128xf32>
    %12 = math.log %11 : vector<16x128xf32>
    %cst_5 = arith.constant -1.000000e+02 : f32
    %13 = vector.broadcast %cst_5 : f32 to vector<16x128xf32>
    %14 = arith.maximumf %12, %13 : vector<16x128xf32>
    %15 = arith.mulf %5, %9 : vector<16x128xf32>
    %cst_6 = arith.constant 1.000000e+00 : f32
    %16 = vector.broadcast %cst_6 : f32 to vector<16x128xf32>
    %17 = arith.subf %16, %5 : vector<16x128xf32>
    %18 = arith.mulf %17, %14 : vector<16x128xf32>
    %19 = arith.addf %15, %18 : vector<16x128xf32>
    %cst_7 = arith.constant 0.000000e+00 : f32
    %20 = vector.broadcast %cst_7 : f32 to vector<16x128xf32>
    %21 = arith.subf %20, %19 : vector<16x128xf32>
    %c16_i32 = arith.constant 16 : i32
    %22 = arith.muli %1, %c16_i32 : i32
    %23 = tpu.iota {dimensions = array<i32: 0>} : vector<16x128xi32>
    %24 = vector.broadcast %22 : i32 to vector<16x128xi32>
    %25 = arith.addi %24, %23 : vector<16x128xi32>
    %c16_i32_8 = arith.constant 16 : i32
    %26 = vector.broadcast %c16_i32_8 : i32 to vector<16x128xi32>
    %27 = arith.cmpi slt, %25, %26 : vector<16x128xi32>
    %cst_9 = arith.constant 0.000000e+00 : f32
    %28 = vector.broadcast %cst_9 : f32 to vector<16x128xf32>
    %29 = arith.select %27, %21, %28 : vector<16x128xi1>, vector<16x128xf32>
    %c0_10 = arith.constant 0 : index
    %c0_11 = arith.constant 0 : index
    %30 = vector.load %arg7[%c0_10, %c0_11] : memref<1x128xf32, #tpu.memory_space<vmem>>, vector<1x128xf32>
    %cst_12 = arith.constant dense<0.000000e+00> : vector<128xf32>
    %31 = vector.multi_reduction <add>, %29, %cst_12 [0] : vector<16x128xf32> to vector<128xf32>
    %32 = vector.shape_cast %31 : vector<128xf32> to vector<1x128xf32>
    %33 = arith.addf %30, %32 : vector<1x128xf32>
    %c0_13 = arith.constant 0 : index
    %c0_14 = arith.constant 0 : index
    %34 = vector.load %arg7[%c0_13, %c0_14] : memref<1x128xf32, #tpu.memory_space<vmem>>, vector<1x128xf32>
    tpu.vector_store %arg7[%c0_13, %c0_14], %33 {strides = array<i32>} : memref<1x128xf32, #tpu.memory_space<vmem>>, vector<1x128xf32>,
    %c0_i32_15 = arith.constant 0 : i32
    %35 = arith.cmpi eq, %arg1, %c0_i32_15 : i32
    %36 = arith.extui %35 : i1 to i32
    %c0_i32_16 = arith.constant 0 : i32
    %37 = arith.cmpi ne, %36, %c0_i32_16 : i32
    scf.if %37 {
      %c0_17 = arith.constant 0 : index
      %c0_18 = arith.constant 0 : index
      %38 = vector.load %arg7[%c0_17, %c0_18] : memref<1x128xf32, #tpu.memory_space<vmem>>, vector<1x128xf32>
      %39 = vector.shape_cast %38 : vector<1x128xf32> to vector<1x1x128xf32>
      %cst_19 = arith.constant dense<0.000000e+00> : vector<1xf32>
      %40 = vector.multi_reduction <add>, %39, %cst_19 [1, 2] : vector<1x1x128xf32> to vector<1xf32>
      %41 = vector.shape_cast %40 : vector<1xf32> to vector<1x1x1xf32>
      %42 = vector.extract %41[0, 0, 0] : f32 from vector<1x1x1xf32>
      %c0_20 = arith.constant 0 : index
      %c0_21 = arith.constant 0 : index
      %c0_22 = arith.constant 0 : index
      %43 = vector.load %arg4[%c0_20, %c0_21, %c0_22] : memref<2x2x32xf32, #tpu.memory_space<vmem>>, vector<2x2x32xf32>
      %44 = vector.extract_strided_slice %43 {offsets = [0, 0, 0], sizes = [1, 2, 32], strides = [1, 1, 1]} : vector<2x2x32xf32> to vector<1x2x32xf32>
      %45 = vector.shape_cast %44 : vector<1x2x32xf32> to vector<2x32xf32>
      %46 = vector.extract_strided_slice %43 {offsets = [1, 0, 0], sizes = [1, 2, 32], strides = [1, 1, 1]} : vector<2x2x32xf32> to vector<1x2x32xf32>
      %47 = vector.shape_cast %46 : vector<1x2x32xf32> to vector<2x32xf32>
      %cst_23 = arith.constant 1.000000e+00 : f32
      %48 = vector.broadcast %cst_23 : f32 to vector<2x32xf32>
      %49 = arith.addf %48, %47 : vector<2x32xf32>
      %50 = arith.mulf %45, %45 : vector<2x32xf32>
      %51 = arith.subf %49, %50 : vector<2x32xf32>
      %52 = math.exp %47 : vector<2x32xf32>
      %53 = arith.subf %51, %52 : vector<2x32xf32>
      %54 = vector.shape_cast %53 : vector<2x32xf32> to vector<1x2x32xf32>
      %cst_24 = arith.constant dense<0.000000e+00> : vector<1xf32>
      %55 = vector.multi_reduction <add>, %54, %cst_24 [1, 2] : vector<1x2x32xf32> to vector<1xf32>
      %56 = vector.shape_cast %55 : vector<1xf32> to vector<1x1x1xf32>
      %57 = vector.extract %56[0, 0, 0] : f32 from vector<1x1x1xf32>
      %cst_25 = arith.constant 6.400000e+01 : f32
      %58 = arith.divf %57, %cst_25 : f32
      %cst_26 = arith.constant -5.000000e-01 : f32
      %59 = arith.mulf %cst_26, %58 : f32
      %c0_27 = arith.constant 0 : index
      %c0_28 = arith.constant 0 : index
      %c0_29 = arith.constant 0 : index
      %60 = vector.load %arg5[%c0_27, %c0_28, %c0_29] : memref<6x8x32xf32, #tpu.memory_space<vmem>>, vector<6x8x32xf32>
      %61 = vector.extract_strided_slice %60 {offsets = [0, 0, 0], sizes = [1, 8, 32], strides = [1, 1, 1]} : vector<6x8x32xf32> to vector<1x8x32xf32>
      %62 = vector.shape_cast %61 : vector<1x8x32xf32> to vector<8x32xf32>
      %63 = vector.extract_strided_slice %60 {offsets = [1, 0, 0], sizes = [1, 8, 32], strides = [1, 1, 1]} : vector<6x8x32xf32> to vector<1x8x32xf32>
      %64 = vector.shape_cast %63 : vector<1x8x32xf32> to vector<8x32xf32>
      %65 = vector.extract_strided_slice %60 {offsets = [2, 0, 0], sizes = [1, 8, 32], strides = [1, 1, 1]} : vector<6x8x32xf32> to vector<1x8x32xf32>
      %66 = vector.shape_cast %65 : vector<1x8x32xf32> to vector<8x32xf32>
      %67 = vector.extract_strided_slice %60 {offsets = [3, 0, 0], sizes = [1, 8, 32], strides = [1, 1, 1]} : vector<6x8x32xf32> to vector<1x8x32xf32>
      %68 = vector.shape_cast %67 : vector<1x8x32xf32> to vector<8x32xf32>
      %69 = vector.extract_strided_slice %60 {offsets = [4, 0, 0], sizes = [1, 8, 32], strides = [1, 1, 1]} : vector<6x8x32xf32> to vector<1x8x32xf32>
      %70 = vector.shape_cast %69 : vector<1x8x32xf32> to vector<8x32xf32>
      %71 = vector.extract_strided_slice %60 {offsets = [5, 0, 0], sizes = [1, 8, 32], strides = [1, 1, 1]} : vector<6x8x32xf32> to vector<1x8x32xf32>
      %72 = vector.shape_cast %71 : vector<1x8x32xf32> to vector<8x32xf32>
      %73 = math.exp %64 : vector<8x32xf32>
      %74 = math.exp %68 : vector<8x32xf32>
      %75 = math.exp %72 : vector<8x32xf32>
      %76 = arith.mulf %62, %62 : vector<8x32xf32>
      %77 = arith.mulf %66, %66 : vector<8x32xf32>
      %78 = arith.mulf %70, %70 : vector<8x32xf32>
      %79 = arith.mulf %74, %74 : vector<8x32xf32>
      %80 = arith.mulf %75, %75 : vector<8x32xf32>
      %81 = arith.addf %77, %74 : vector<8x32xf32>
      %82 = arith.subf %81, %78 : vector<8x32xf32>
      %83 = arith.subf %82, %75 : vector<8x32xf32>
      %cst_30 = arith.constant 2.000000e+00 : f32
      %84 = vector.broadcast %cst_30 : f32 to vector<8x32xf32>
      %85 = arith.mulf %84, %62 : vector<8x32xf32>
      %86 = arith.subf %66, %70 : vector<8x32xf32>
      %87 = arith.mulf %85, %86 : vector<8x32xf32>
      %88 = arith.subf %83, %87 : vector<8x32xf32>
      %cst_31 = arith.constant dense<0.000000e+00> : vector<8xf32>
      %89 = vector.multi_reduction <add>, %88, %cst_31 [1] : vector<8x32xf32> to vector<8xf32>
      %90 = vector.shape_cast %89 : vector<8xf32> to vector<8x1xf32>
      %cst_32 = arith.constant 2.000000e+00 : f32
      %91 = vector.broadcast %cst_32 : f32 to vector<8x32xf32>
      %92 = arith.mulf %91, %77 : vector<8x32xf32>
      %93 = arith.mulf %92, %74 : vector<8x32xf32>
      %94 = arith.addf %79, %93 : vector<8x32xf32>
      %95 = arith.addf %73, %76 : vector<8x32xf32>
      %cst_33 = arith.constant 2.000000e+00 : f32
      %96 = vector.broadcast %cst_33 : f32 to vector<8x32xf32>
      %97 = arith.mulf %96, %95 : vector<8x32xf32>
      %98 = arith.addf %74, %77 : vector<8x32xf32>
      %99 = arith.mulf %97, %98 : vector<8x32xf32>
      %100 = arith.addf %94, %99 : vector<8x32xf32>
      %cst_34 = arith.constant 2.000000e+00 : f32
      %101 = vector.broadcast %cst_34 : f32 to vector<8x32xf32>
      %102 = arith.mulf %101, %76 : vector<8x32xf32>
      %103 = arith.mulf %102, %77 : vector<8x32xf32>
      %104 = arith.subf %100, %103 : vector<8x32xf32>
      %cst_35 = arith.constant 4.000000e+00 : f32
      %105 = vector.broadcast %cst_35 : f32 to vector<8x32xf32>
      %106 = arith.mulf %105, %62 : vector<8x32xf32>
      %107 = arith.mulf %106, %66 : vector<8x32xf32>
      %108 = arith.mulf %107, %74 : vector<8x32xf32>
      %109 = arith.subf %104, %108 : vector<8x32xf32>
      %cst_36 = arith.constant 2.000000e+00 : f32
      %110 = vector.broadcast %cst_36 : f32 to vector<8x32xf32>
      %111 = arith.mulf %110, %78 : vector<8x32xf32>
      %112 = arith.mulf %111, %75 : vector<8x32xf32>
      %113 = arith.addf %80, %112 : vector<8x32xf32>
      %114 = arith.addf %73, %76 : vector<8x32xf32>
      %cst_37 = arith.constant 2.000000e+00 : f32
      %115 = vector.broadcast %cst_37 : f32 to vector<8x32xf32>
      %116 = arith.mulf %115, %114 : vector<8x32xf32>
      %117 = arith.addf %75, %78 : vector<8x32xf32>
      %118 = arith.mulf %116, %117 : vector<8x32xf32>
      %119 = arith.addf %113, %118 : vector<8x32xf32>
      %cst_38 = arith.constant 2.000000e+00 : f32
      %120 = vector.broadcast %cst_38 : f32 to vector<8x32xf32>
      %121 = arith.mulf %120, %76 : vector<8x32xf32>
      %122 = arith.mulf %121, %78 : vector<8x32xf32>
      %123 = arith.subf %119, %122 : vector<8x32xf32>
      %cst_39 = arith.constant 4.000000e+00 : f32
      %124 = vector.broadcast %cst_39 : f32 to vector<8x32xf32>
      %125 = arith.mulf %124, %62 : vector<8x32xf32>
      %126 = arith.mulf %125, %70 : vector<8x32xf32>
      %127 = arith.mulf %126, %75 : vector<8x32xf32>
      %128 = arith.subf %123, %127 : vector<8x32xf32>
      %cst_40 = arith.constant 4.000000e+00 : f32
      %129 = vector.broadcast %cst_40 : f32 to vector<8x32xf32>
      %130 = arith.mulf %129, %66 : vector<8x32xf32>
      %131 = arith.mulf %130, %70 : vector<8x32xf32>
      %132 = arith.mulf %131, %73 : vector<8x32xf32>
      %cst_41 = arith.constant 2.000000e+00 : f32
      %133 = vector.broadcast %cst_41 : f32 to vector<8x32xf32>
      %134 = arith.mulf %133, %109 : vector<8x32xf32>
      %cst_42 = arith.constant 2.000000e+00 : f32
      %135 = vector.broadcast %cst_42 : f32 to vector<8x32xf32>
      %136 = arith.mulf %135, %128 : vector<8x32xf32>
      %137 = arith.addf %134, %136 : vector<8x32xf32>
      %cst_43 = arith.constant 2.000000e+00 : f32
      %138 = vector.broadcast %cst_43 : f32 to vector<8x32xf32>
      %139 = arith.mulf %138, %132 : vector<8x32xf32>
      %140 = arith.subf %137, %139 : vector<8x32xf32>
      %cst_44 = arith.constant dense<0.000000e+00> : vector<8xf32>
      %141 = vector.multi_reduction <add>, %140, %cst_44 [1] : vector<8x32xf32> to vector<8xf32>
      %142 = vector.shape_cast %141 : vector<8xf32> to vector<8x1xf32>
      %cst_45 = arith.constant 0.000000e+00 : f32
      %143 = vector.broadcast %cst_45 : f32 to vector<8x1xf32>
      %144 = arith.maximumf %142, %143 : vector<8x1xf32>
      %145 = math.sqrt %144 : vector<8x1xf32>
      %cst_46 = arith.constant -1.000000e+00 : f32
      %146 = vector.broadcast %cst_46 : f32 to vector<8x1xf32>
      %147 = arith.subf %146, %90 : vector<8x1xf32>
      %cst_47 = arith.constant 9.99999993E-9 : f32
      %148 = vector.broadcast %cst_47 : f32 to vector<8x1xf32>
      %149 = arith.addf %145, %148 : vector<8x1xf32>
      %150 = arith.divf %147, %149 : vector<8x1xf32>
      %cst_48 = arith.constant 0.707106769 : f32
      %151 = vector.broadcast %cst_48 : f32 to vector<8x1xf32>
      %152 = arith.mulf %150, %151 : vector<8x1xf32>
      %153 = math.erf %152 : vector<8x1xf32>
      %cst_49 = arith.constant 1.000000e+00 : f32
      %154 = vector.broadcast %cst_49 : f32 to vector<8x1xf32>
      %155 = arith.addf %154, %153 : vector<8x1xf32>
      %cst_50 = arith.constant 5.000000e-01 : f32
      %156 = vector.broadcast %cst_50 : f32 to vector<8x1xf32>
      %157 = arith.mulf %156, %155 : vector<8x1xf32>
      %cst_51 = arith.constant 9.99999993E-9 : f32
      %158 = vector.broadcast %cst_51 : f32 to vector<8x1xf32>
      %159 = arith.addf %157, %158 : vector<8x1xf32>
      %160 = math.log %159 : vector<8x1xf32>
      %cst_52 = arith.constant 0.000000e+00 : f32
      %161 = vector.broadcast %cst_52 : f32 to vector<8x1xf32>
      %162 = arith.subf %161, %160 : vector<8x1xf32>
      %163 = vector.shape_cast %162 : vector<8x1xf32> to vector<1x8x1xf32>
      %cst_53 = arith.constant dense<0.000000e+00> : vector<1xf32>
      %164 = vector.multi_reduction <add>, %163, %cst_53 [1, 2] : vector<1x8x1xf32> to vector<1xf32>
      %165 = vector.shape_cast %164 : vector<1xf32> to vector<1x1x1xf32>
      %166 = vector.extract %165[0, 0, 0] : f32 from vector<1x1x1xf32>
      %cst_54 = arith.constant 8.000000e+00 : f32
      %167 = arith.divf %166, %cst_54 : f32
      %168 = arith.subf %62, %66 : vector<8x32xf32>
      %169 = arith.mulf %168, %168 : vector<8x32xf32>
      %cst_55 = arith.constant dense<0.000000e+00> : vector<8xf32>
      %170 = vector.multi_reduction <add>, %169, %cst_55 [1] : vector<8x32xf32> to vector<8xf32>
      %171 = vector.shape_cast %170 : vector<8xf32> to vector<8x1xf32>
      %172 = arith.subf %62, %70 : vector<8x32xf32>
      %173 = arith.mulf %172, %172 : vector<8x32xf32>
      %cst_56 = arith.constant dense<0.000000e+00> : vector<8xf32>
      %174 = vector.multi_reduction <add>, %173, %cst_56 [1] : vector<8x32xf32> to vector<8xf32>
      %175 = vector.shape_cast %174 : vector<8xf32> to vector<8x1xf32>
      %176 = arith.cmpf olt, %171, %175 : vector<8x1xf32>
      %177 = arith.extui %176 : vector<8x1xi1> to vector<8x1xi32>
      %178 = arith.sitofp %177 : vector<8x1xi32> to vector<8x1xf32>
      %179 = vector.shape_cast %178 : vector<8x1xf32> to vector<1x8x1xf32>
      %cst_57 = arith.constant dense<0.000000e+00> : vector<1xf32>
      %180 = vector.multi_reduction <add>, %179, %cst_57 [1, 2] : vector<1x8x1xf32> to vector<1xf32>
      %181 = vector.shape_cast %180 : vector<1xf32> to vector<1x1x1xf32>
      %182 = vector.extract %181[0, 0, 0] : f32 from vector<1x1x1xf32>
      %cst_58 = arith.constant 8.000000e+00 : f32
      %183 = arith.divf %182, %cst_58 : f32
      %184 = tpu.iota {dimensions = array<i32: 1>} : vector<1x8x128xi32>
      %c0_i32_59 = arith.constant 0 : i32
      %185 = vector.broadcast %c0_i32_59 : i32 to vector<1x8x128xi32>
      %186 = arith.cmpi eq, %184, %185 : vector<1x8x128xi32>
      %cst_60 = arith.constant 0.000000e+00 : f32
      %187 = vector.broadcast %42 : f32 to vector<1x8x128xf32>
      %188 = vector.broadcast %cst_60 : f32 to vector<1x8x128xf32>
      %189 = arith.select %186, %187, %188 : vector<1x8x128xi1>, vector<1x8x128xf32>
      %c1_i32_61 = arith.constant 1 : i32
      %190 = vector.broadcast %c1_i32_61 : i32 to vector<1x8x128xi32>
      %191 = arith.cmpi eq, %184, %190 : vector<1x8x128xi32>
      %192 = vector.broadcast %59 : f32 to vector<1x8x128xf32>
      %193 = arith.select %191, %192, %189 : vector<1x8x128xi1>, vector<1x8x128xf32>
      %c2_i32 = arith.constant 2 : i32
      %194 = vector.broadcast %c2_i32 : i32 to vector<1x8x128xi32>
      %195 = arith.cmpi eq, %184, %194 : vector<1x8x128xi32>
      %196 = vector.broadcast %167 : f32 to vector<1x8x128xf32>
      %197 = arith.select %195, %196, %193 : vector<1x8x128xi1>, vector<1x8x128xf32>
      %c3_i32 = arith.constant 3 : i32
      %198 = vector.broadcast %c3_i32 : i32 to vector<1x8x128xi32>
      %199 = arith.cmpi eq, %184, %198 : vector<1x8x128xi32>
      %200 = vector.broadcast %183 : f32 to vector<1x8x128xf32>
      %201 = arith.select %199, %200, %197 : vector<1x8x128xi1>, vector<1x8x128xf32>
      %c0_62 = arith.constant 0 : index
      %c0_63 = arith.constant 0 : index
      %c0_64 = arith.constant 0 : index
      %202 = vector.load %arg6[%c0_62, %c0_63, %c0_64] : memref<1x8x128xf32, #tpu.memory_space<vmem>>, vector<1x8x128xf32>
      tpu.vector_store %arg6[%c0_62, %c0_63, %c0_64], %201 {strides = array<i32>} : memref<1x8x128xf32, #tpu.memory_space<vmem>>, vector<1x8x128xf32>,
    } else {
    }
    return
  }
  func.func @transform_0(%arg0: i32, %arg1: i32) -> (i32, i32) {
    %c1_i32 = arith.constant 1 : i32
    %0 = arith.muli %arg0, %c1_i32 : i32
    %1 = arith.addi %0, %arg1 : i32
    %c0_i32 = arith.constant 0 : i32
    %2 = arith.minsi %1, %c0_i32 : i32
    %c0_i32_0 = arith.constant 0 : i32
    %c0_i32_1 = arith.constant 0 : i32
    return %2, %c0_i32_0 : i32, i32
  }
  func.func @transform_1(%arg0: i32, %arg1: i32) -> (i32, i32) {
    %c1_i32 = arith.constant 1 : i32
    %0 = arith.muli %arg0, %c1_i32 : i32
    %1 = arith.addi %0, %arg1 : i32
    %c0_i32 = arith.constant 0 : i32
    %2 = arith.minsi %1, %c0_i32 : i32
    %c0_i32_0 = arith.constant 0 : i32
    %c0_i32_1 = arith.constant 0 : i32
    return %2, %c0_i32_0 : i32, i32
  }
  func.func @transform_2(%arg0: i32, %arg1: i32) -> (i32, i32, i32) {
    %c0_i32 = arith.constant 0 : i32
    %c0_i32_0 = arith.constant 0 : i32
    %c0_i32_1 = arith.constant 0 : i32
    %c0_i32_2 = arith.constant 0 : i32
    return %c0_i32, %c0_i32_0, %c0_i32_1 : i32, i32, i32
  }
  func.func @transform_3(%arg0: i32, %arg1: i32) -> (i32, i32, i32) {
    %c0_i32 = arith.constant 0 : i32
    %c0_i32_0 = arith.constant 0 : i32
    %c0_i32_1 = arith.constant 0 : i32
    %c0_i32_2 = arith.constant 0 : i32
    return %c0_i32, %c0_i32_0, %c0_i32_1 : i32, i32, i32
  }
  func.func @transform_4(%arg0: i32, %arg1: i32) -> (i32, i32, i32) {
    %c0_i32 = arith.constant 0 : i32
    %c0_i32_0 = arith.constant 0 : i32
    %c0_i32_1 = arith.constant 0 : i32
    return %arg0, %c0_i32, %c0_i32_0 : i32, i32, i32
  }
}

</mosaic_0001>

<llo_original>
// kernel: tpu_custom_call.1
$region0: #{tpu_custom_call.1}
  #allocation0 [shape = 'u32[]', space=smem, size = 0x4, offset = 0x4, fixed_abs, tag = 'smem constant byte address 0x4 - core index']
  #allocation1 [shape = 'u32[144,128]{1,0:T(1,128)}', space=vmem, size = 0x12000, scoped, tag = 'internal scratch']
  #allocation2 [shape = 'f32[1,128]{1,0:T(1,128)}', space=vmem, size = 0x200, scoped, tag = 'scratch operand']
  %s0 = inlined_call_operand.hbm [shape: f32[16,128], index: 0, kind: input, shape index: {}]
  %s1 = inlined_call_operand.hbm [shape: f32[16,128], index: 1, kind: input, shape index: {}]
  %s2 = inlined_call_operand.hbm [shape: f32[2,2,32], index: 2, kind: input, shape index: {}]
  %s3 = inlined_call_operand.hbm [shape: f32[6,8,32], index: 3, kind: input, shape index: {}]
  %s4 = inlined_call_operand.hbm [shape: f32[2,8,128], index: 4, kind: output, shape index: {}]
  %s5 = sld [smem:[#allocation0]]
  $region73: #{tpu_custom_call.1} parent=0
    _
  %s7 = ssub.s32 1, %s5
  %s8 = scalar_select 0, %s7, %s5
  $region1: #{tpu_custom_call.1} parent=0
    #allocation3 [shape = 'u8[16384]{0}', space=vmem, size = 0x4000, scoped, tag = 'input window, operand 0']
    #allocation4 [shape = 's32[2]{0}', space=sflag, size = 0x8, scoped, tag = 'scoped memory for tpu_custom_call.1']
    #allocation5 [shape = 's32[2]{0}', space=sflag, size = 0x8, scoped, tag = 'scoped memory for tpu_custom_call.1']
    #allocation6 [shape = 'u8[16384]{0}', space=vmem, size = 0x4000, scoped, tag = 'input window, operand 1']
    #allocation7 [shape = 's32[2]{0}', space=sflag, size = 0x8, scoped, tag = 'scoped memory for tpu_custom_call.1']
    #allocation8 [shape = 'u8[2048]{0}', space=vmem, size = 0x800, scoped, tag = 'input window, operand 2, single buffered']
    #allocation9 [shape = 'u8[24576]{0}', space=vmem, size = 0x6000, scoped, tag = 'input window, operand 3, single buffered']
    #allocation10 [shape = 's32[1]{0}', space=sflag, size = 0x4, scoped, tag = 'scoped memory for tpu_custom_call.1']
    #allocation11 [shape = 'u8[8192]{0}', space=vmem, size = 0x2000, scoped, tag = 'output window, operand 0']
    %9 = vsyncpa [#allocation4], 0
    %s10 = scalar_lea.sflag [#allocation4], 1
    %11 = vsyncpa %s10, 0
    %12 = vsyncpa [#allocation7], 0
    %s13 = scalar_lea.sflag [#allocation7], 1
    %14 = vsyncpa %s13, 0
    %15 = vsyncpa [#allocation10], 0
    %16 = vsyncpa [#allocation5], 0
    %s17 = scalar_lea.sflag [#allocation5], 1
    %18 = vsyncpa %s17, 0
    loop: start=0, step=1, limit=4
    $region2: #{tpu_custom_call.1} parent=1 // loop_pre_header
      _
    $region3: #{tpu_custom_call.1} parent=1 // loop_header
      %s20 = sphi 0, %s24
      %p21 = scmp.ge.s32.totalorder %s20, 4
      %s27 = sphi 0, %s39
      %s28 = sphi 0, %s35
      %s29 = sphi 0, %s27
      %s30 = sphi 0, %s28
      %s31 = sphi 0, %s29
      %s32 = sphi 0, %s30
      %s48 = sphi 0, %s50
      %s51 = sphi 0, %s48
      %s52 = sphi 0, %s51
      %s68 = sphi 0, %s52
      %s80 = sphi 0, %s82
      %s83 = sphi 0, %s80
      %s84 = sphi 0, %s83
      %s100 = sphi 0, %s84
      %s104 = sphi 0, %s104
      %s106 = sphi 0, %s104
      %s107 = sphi 0, %s106
      %s121 = sphi 0, %s107
      %s125 = sphi 0, %s125
      %s127 = sphi 0, %s125
      %s128 = sphi 0, %s127
      %s142 = sphi 0, %s128
      %s148 = sphi 0, %s150
      %s151 = sphi 0, %s148
      %s152 = sphi 0, %s151
      %s168 = sphi 0, %s152
    $region4: #{tpu_custom_call.1} parent=1 // loop_header_branch
      %23 = sbr.rel (%p21) target = $region8
    $region5: #{tpu_custom_call.1} parent=1 // loop_body
      %s25 = ssub.s32 %s20, 1
      %s26 = ssub.s32 %s20, 2
      %s33 = sadd.s32 1, %s28
      %p34 = scmp.ge.s32.totalorder %s33, 1
      %s35 = scalar_select %p34, 0, %s33
      %s36 = sadd.s32 1, %s27
      %s37 = scalar_select %p34, %s36, %s27
      %p38 = scmp.ge.s32.totalorder %s37, 2
      %s39 = scalar_select %p38, 0, %s37
      %s40 = sadd.s32 %s27, %s28
      %p41 = scmp.lt.s32.totalorder %s40, 0
      %s42 = scalar_select %p41, %s40, 0
      %s43 = sadd.s32 %s39, %s35
      %p44 = scmp.lt.s32.totalorder %s43, 0
      %s45 = scalar_select %p44, %s43, 0
      %s46 = ssub.s32 %s42, %s45
      %p47 = scmp.eq.s32.totalorder %s46, 0
      %s49 = sadd.s32 %s48, 1
      %s50 = scalar_select %p47, %s48, %s49
      %p53 = pneg %p47
      %p54 = scmp.eq.s32.totalorder %s20, 1
      %p55 = por %p53, %p54
      %p56 = scmp.ne.s32.totalorder %s48, %s51
      %p57 = scmp.eq.s32.totalorder %s20, 0
      %p58 = por %p56, %p57
      %p59 = scmp.ne.s32.totalorder %s48, %s51
      %p60 = scmp.eq.s32.totalorder %s25, 1
      %p61 = por %p59, %p60
      %p62 = scmp.ne.s32.totalorder %s51, %s52
      %p63 = scmp.eq.s32.totalorder %s25, 0
      %p64 = por %p62, %p63
      %p65 = scmp.ne.s32.totalorder %s51, %s52
      %p66 = scmp.eq.s32.totalorder %s26, 1
      %p67 = por %p65, %p66
      %p69 = scmp.ne.s32.totalorder %s52, %s68
      %p70 = scmp.eq.s32.totalorder %s26, 0
      %p71 = por %p69, %p70
      %s72 = sadd.s32 %s27, %s28
      %p73 = scmp.lt.s32.totalorder %s72, 0
      %s74 = scalar_select %p73, %s72, 0
      %s75 = sadd.s32 %s39, %s35
      %p76 = scmp.lt.s32.totalorder %s75, 0
      %s77 = scalar_select %p76, %s75, 0
      %s78 = ssub.s32 %s74, %s77
      %p79 = scmp.eq.s32.totalorder %s78, 0
      %s81 = sadd.s32 %s80, 1
      %s82 = scalar_select %p79, %s80, %s81
      %p85 = pneg %p79
      %p86 = scmp.eq.s32.totalorder %s20, 1
      %p87 = por %p85, %p86
      %p88 = scmp.ne.s32.totalorder %s80, %s83
      %p89 = scmp.eq.s32.totalorder %s20, 0
      %p90 = por %p88, %p89
      %p91 = scmp.ne.s32.totalorder %s80, %s83
      %p92 = scmp.eq.s32.totalorder %s25, 1
      %p93 = por %p91, %p92
      %p94 = scmp.ne.s32.totalorder %s83, %s84
      %p95 = scmp.eq.s32.totalorder %s25, 0
      %p96 = por %p94, %p95
      %p97 = scmp.ne.s32.totalorder %s83, %s84
      %p98 = scmp.eq.s32.totalorder %s26, 1
      %p99 = por %p97, %p98
      %p101 = scmp.ne.s32.totalorder %s84, %s100
      %p102 = scmp.eq.s32.totalorder %s26, 0
      %p103 = por %p101, %p102
      %s105 = sadd.s32 %s104, 1
      %p108 = scmp.eq.s32.totalorder %s20, 1
      %p109 = scmp.ne.s32.totalorder %s104, %s106
      %p110 = scmp.eq.s32.totalorder %s20, 0
      %p111 = por %p109, %p110
      %p112 = scmp.ne.s32.totalorder %s104, %s106
      %p113 = scmp.eq.s32.totalorder %s25, 1
      %p114 = por %p112, %p113
      %p115 = scmp.ne.s32.totalorder %s106, %s107
      %p116 = scmp.eq.s32.totalorder %s25, 0
      %p117 = por %p115, %p116
      %p118 = scmp.ne.s32.totalorder %s106, %s107
      %p119 = scmp.eq.s32.totalorder %s26, 1
      %p120 = por %p118, %p119
      %p122 = scmp.ne.s32.totalorder %s107, %s121
      %p123 = scmp.eq.s32.totalorder %s26, 0
      %p124 = por %p122, %p123
      %s126 = sadd.s32 %s125, 1
      %p129 = scmp.eq.s32.totalorder %s20, 1
      %p130 = scmp.ne.s32.totalorder %s125, %s127
      %p131 = scmp.eq.s32.totalorder %s20, 0
      %p132 = por %p130, %p131
      %p133 = scmp.ne.s32.totalorder %s125, %s127
      %p134 = scmp.eq.s32.totalorder %s25, 1
      %p135 = por %p133, %p134
      %p136 = scmp.ne.s32.totalorder %s127, %s128
      %p137 = scmp.eq.s32.totalorder %s25, 0
      %p138 = por %p136, %p137
      %p139 = scmp.ne.s32.totalorder %s127, %s128
      %p140 = scmp.eq.s32.totalorder %s26, 1
      %p141 = por %p139, %p140
      %p143 = scmp.ne.s32.totalorder %s128, %s142
      %p144 = scmp.eq.s32.totalorder %s26, 0
      %p145 = por %p143, %p144
      %s146 = ssub.s32 %s27, %s39
      %p147 = scmp.eq.s32.totalorder %s146, 0
      %s149 = sadd.s32 %s148, 1
      %s150 = scalar_select %p147, %s148, %s149
      %p153 = pneg %p147
      %p154 = scmp.eq.s32.totalorder %s20, 1
      %p155 = por %p153, %p154
      %p156 = scmp.ne.s32.totalorder %s148, %s151
      %p157 = scmp.eq.s32.totalorder %s20, 0
      %p158 = por %p156, %p157
      %p159 = scmp.ne.s32.totalorder %s148, %s151
      %p160 = scmp.eq.s32.totalorder %s25, 1
      %p161 = por %p159, %p160
      %p162 = scmp.ne.s32.totalorder %s151, %s152
      %p163 = scmp.eq.s32.totalorder %s25, 0
      %p164 = por %p162, %p163
      %p165 = scmp.ne.s32.totalorder %s151, %s152
      %p166 = scmp.eq.s32.totalorder %s26, 1
      %p167 = por %p165, %p166
      %p169 = scmp.ne.s32.totalorder %s152, %s168
      %p170 = scmp.eq.s32.totalorder %s26, 0
      %p171 = por %p169, %p170
      %p172 = scmp.le.s32.totalorder 1, %s20
      %p173 = scmp.lt.s32.totalorder %s20, 3
      %p174 = pnand %p172, %p173
      %p175 = pneg %p174
      // Predicated region
      $region9: #{tpu_custom_call.1} parent=5 // pred_check
        _
      $region10: #{tpu_custom_call.1} parent=5 // pred_check_branch
        %177 = sbr.rel (%p174) target = $region12
      $region11: #{tpu_custom_call.1} parent=5 // pred_region
        %s178 = ssub.s32 %s20, 1
        // Predicated region
        $region13: #{tpu_custom_call.1} parent=11 // pred_check
          %p179 = pneg %p117
        $region14: #{tpu_custom_call.1} parent=11 // pred_check_branch
          %181 = sbr.rel (%p179) target = $region16
        $region15: #{tpu_custom_call.1} parent=11 // pred_region
          %s183 = ssub.s32 64, 64
          %184 = vsyncadd [#allocation7], %s183
          %s185 = sshll.u32 [#allocation8], 4
          %s186 = int_to_ptr.vmem [resolvable:$true] %s185
          %191 = dma.hbm_to_vmem [thread:$0]  %s2, 64, %s186, [#allocation7], 32, 32, 2
        $region16: #{tpu_custom_call.1} parent=11 // pred_fallthru
          _
        // Predicated region
        $region17: #{tpu_custom_call.1} parent=11 // pred_check
          %p192 = pneg %p138
        $region18: #{tpu_custom_call.1} parent=11 // pred_check_branch
          %194 = sbr.rel (%p192) target = $region20
        $region19: #{tpu_custom_call.1} parent=11 // pred_region
          %s196 = ssub.s32 768, 768
          %197 = vsyncadd [#allocation10], %s196
          %s198 = sshll.u32 [#allocation9], 4
          %s199 = int_to_ptr.vmem [resolvable:$true] %s198
          %204 = dma.hbm_to_vmem [thread:$0]  %s3, 768, %s199, [#allocation10], 128, 128, 8
        $region20: #{tpu_custom_call.1} parent=11 // pred_fallthru
          _
      $region12: #{tpu_custom_call.1} parent=5 // pred_fallthru
        _
      %p205 = scmp.lt.s32.totalorder %s20, 2
      // Predicated region
      $region21: #{tpu_custom_call.1} parent=5 // pred_check
        %p206 = pneg %p205
      $region22: #{tpu_custom_call.1} parent=5 // pred_check_branch
        %208 = sbr.rel (%p206) target = $region24
      $region23: #{tpu_custom_call.1} parent=5 // pred_region
        // Predicated region
        $region25: #{tpu_custom_call.1} parent=23 // pred_check
          %p209 = pneg %p58
        $region26: #{tpu_custom_call.1} parent=23 // pred_check_branch
          %211 = sbr.rel (%p209) target = $region28
        $region27: #{tpu_custom_call.1} parent=23 // pred_region
          %s212 = sand.u32 %s48, 1
          %s213 = scalar_lea.sflag [#allocation4], %s212
          %s214 = sand.u32 %s48, 1
          %s215 = smul.addr %s214, 16
          %s216 = scalar_lea.vmem [#allocation3], %s215
          %s217 = sadd.s32 %s27, %s28
          %p218 = scmp.lt.s32.totalorder %s217, 0
          %s219 = scalar_select %p218, %s217, 0
          %s220 = smul.u32 2, %s219
          %s222 = ssub.s32 256, 256
          %223 = vsyncadd %s213, %s222
          %s224 = smul.addr %s220, 128
          %s225 = scalar_lea.hbm %s0, %s224
          %s226 = sshll.u32 %s216, 4
          %s227 = int_to_ptr.vmem [resolvable:$true] %s226
          %232 = dma.hbm_to_vmem [thread:$0]  %s225, 256, %s227, %s213, 128, 128, 8
        $region28: #{tpu_custom_call.1} parent=23 // pred_fallthru
          _
        // Predicated region
        $region29: #{tpu_custom_call.1} parent=23 // pred_check
          %p233 = pneg %p90
        $region30: #{tpu_custom_call.1} parent=23 // pred_check_branch
          %235 = sbr.rel (%p233) target = $region32
        $region31: #{tpu_custom_call.1} parent=23 // pred_region
          %s236 = sand.u32 %s20, 1
          %s237 = scalar_lea.sflag [#allocation7], %s236
          %s238 = sand.u32 %s80, 1
          %s239 = smul.addr %s238, 16
          %s240 = scalar_lea.vmem [#allocation6], %s239
          %s241 = sadd.s32 %s27, %s28
          %p242 = scmp.lt.s32.totalorder %s241, 0
          %s243 = scalar_select %p242, %s241, 0
          %s244 = smul.u32 2, %s243
          %s246 = ssub.s32 256, 256
          %247 = vsyncadd %s237, %s246
          %s248 = smul.addr %s244, 128
          %s249 = scalar_lea.hbm %s1, %s248
          %s250 = sshll.u32 %s240, 4
          %s251 = int_to_ptr.vmem [resolvable:$true] %s250
          %256 = dma.hbm_to_vmem [thread:$0]  %s249, 256, %s251, %s237, 128, 128, 8
        $region32: #{tpu_custom_call.1} parent=23 // pred_fallthru
          _
      $region24: #{tpu_custom_call.1} parent=5 // pred_fallthru
        _
      %p257 = scmp.le.s32.totalorder 1, %s20
      %p258 = scmp.lt.s32.totalorder %s20, 3
      %p259 = pnand %p257, %p258
      %p260 = pneg %p259
      // Predicated region
      $region33: #{tpu_custom_call.1} parent=5 // pred_check
        _
      $region34: #{tpu_custom_call.1} parent=5 // pred_check_branch
        %262 = sbr.rel (%p259) target = $region36
      $region35: #{tpu_custom_call.1} parent=5 // pred_region
        %s263 = ssub.s32 %s20, 1
        %s264 = sand.u32 %s51, 1
        %s265 = scalar_lea.sflag [#allocation4], %s264
        %s266 = sand.u32 %s51, 1
        %s267 = smul.addr %s266, 16
        %s268 = scalar_lea.vmem [#allocation3], %s267
        // Predicated region
        $region37: #{tpu_custom_call.1} parent=35 // pred_check
          %p269 = pneg %p64
        $region38: #{tpu_custom_call.1} parent=35 // pred_check_branch
          %271 = sbr.rel (%p269) target = $region40
        $region39: #{tpu_custom_call.1} parent=35 // pred_region
          %272 = dma.done %s265, 256
        $region40: #{tpu_custom_call.1} parent=35 // pred_fallthru
          _
        %s273 = sand.u32 %s25, 1
        %s274 = scalar_lea.sflag [#allocation7], %s273
        %s275 = sand.u32 %s83, 1
        %s276 = smul.addr %s275, 16
        %s277 = scalar_lea.vmem [#allocation6], %s276
        // Predicated region
        $region41: #{tpu_custom_call.1} parent=35 // pred_check
          %p278 = pneg %p96
        $region42: #{tpu_custom_call.1} parent=35 // pred_check_branch
          %280 = sbr.rel (%p278) target = $region44
        $region43: #{tpu_custom_call.1} parent=35 // pred_region
          %281 = dma.done %s274, 256
        $region44: #{tpu_custom_call.1} parent=35 // pred_fallthru
          _
        // Predicated region
        $region45: #{tpu_custom_call.1} parent=35 // pred_check
          %p282 = pneg %p117
        $region46: #{tpu_custom_call.1} parent=35 // pred_check_branch
          %284 = sbr.rel (%p282) target = $region48
        $region47: #{tpu_custom_call.1} parent=35 // pred_region
          %285 = dma.done [#allocation7], 64
        $region48: #{tpu_custom_call.1} parent=35 // pred_fallthru
          _
        // Predicated region
        $region49: #{tpu_custom_call.1} parent=35 // pred_check
          %p286 = pneg %p138
        $region50: #{tpu_custom_call.1} parent=35 // pred_check_branch
          %288 = sbr.rel (%p286) target = $region52
        $region51: #{tpu_custom_call.1} parent=35 // pred_region
          %289 = dma.done [#allocation10], 768
        $region52: #{tpu_custom_call.1} parent=35 // pred_fallthru
          _
        %s290 = sand.u32 %s51, 1
        %s291 = scalar_lea.sflag [#allocation4], %s290
        %s292 = sand.u32 %s51, 1
        %s293 = smul.addr %s292, 16
        %s294 = scalar_lea.vmem [#allocation3], %s293
        %p295 = pneg %p64
        %p296 = pneg %p61
        %s297 = sand.u32 %s25, 1
        %s298 = scalar_lea.sflag [#allocation7], %s297
        %s299 = sand.u32 %s83, 1
        %s300 = smul.addr %s299, 16
        %s301 = scalar_lea.vmem [#allocation6], %s300
        %p302 = pneg %p96
        %p303 = pneg %p93
        %p304 = pneg %p117
        %p305 = pneg %p114
        %p306 = pneg %p138
        %p307 = pneg %p135
        %p308 = pneg %p164
        %p309 = pneg %p161
        %s310 = sand.u32 %s151, 1
        %s311 = scalar_lea.sflag [#allocation5], %s310
        %s312 = sand.u32 %s151, 1
        %s313 = smul.addr %s312, 8
        %s314 = scalar_lea.vmem [#allocation11], %s313
        %s315 = sadd.s32 %s29, %s30
        %p316 = scmp.lt.s32.totalorder %s315, 0
        %s317 = scalar_select %p316, %s315, 0
        %s318 = smul.u32 2, %s317
        %s319 = sadd.s32 %s29, %s30
        %p320 = scmp.lt.s32.totalorder %s319, 0
        %s321 = scalar_select %p320, %s319, 0
        %s322 = smul.u32 2, %s321
        %s323 = sadd.s32 %s29, %s30
        %p324 = scmp.eq.s32.totalorder %s30, 0
        // Predicated region
        $region53: #{tpu_custom_call.1} parent=35 // pred_check
          %p325 = pneg %p324
        $region54: #{tpu_custom_call.1} parent=35 // pred_check_branch
          %327 = sbr.rel (%p325) target = $region56
        $region55: #{tpu_custom_call.1} parent=35 // pred_region
          %328 = vst [vmem:[#allocation2] sm:$0x1] 0.0
        $region56: #{tpu_custom_call.1} parent=35 // pred_fallthru
          _
        %v329 = vld [vmem:[%s268] sm:$0xff]
        %v330 = vld [vmem:[%s268 + $0x8] sm:$0xff]
        %v331 = vld [vmem:[%s277] sm:$0xff]
        %v332 = vld [vmem:[%s277 + $0x8] sm:$0xff]
        %v333 = vlog2.pop %v331
        %v334 = vmul.f32 %v333, 0.6931472
        %v335 = vlog2.pop %v332
        %v336 = vmul.f32 %v335, 0.6931472
        %v337 = vmax.f32 %v334, -100.0
        %v338 = vmax.f32 %v336, -100.0
        %v339 = vsub.f32 1.0, %v331
        %v340 = vsub.f32 1.0, %v332
        %v341 = vlog2.pop %v339
        %v342 = vmul.f32 %v341, 0.6931472
        %v343 = vlog2.pop %v340
        %v344 = vmul.f32 %v343, 0.6931472
        %v345 = vmax.f32 %v342, -100.0
        %v346 = vmax.f32 %v344, -100.0
        %v347 = vmul.f32 %v329, %v337
        %v348 = vmul.f32 %v330, %v338
        %v349 = vsub.f32 1.0, %v329
        %v350 = vsub.f32 1.0, %v330
        %v351 = vmul.f32 %v349, %v345
        %v352 = vmul.f32 %v350, %v346
        %v353 = vadd.f32 %v347, %v351
        %v354 = vadd.f32 %v348, %v352
        %v355 = vsub.f32 0.0, %v353
        %v356 = vsub.f32 0.0, %v354
        %s357 = smul.u32 %s323, 16
        %v358 = vlaneseq
        %v359 = vshrl.u32 %v358, 7
        %v360 = vadd.s32 %v359, 8
        %v361 = vstv %s357
        %v362 = vadd.s32 %v361, %v359
        %v363 = vadd.s32 %v361, %v360
        %vm364 = vcmp.lt.s32.totalorder %v362, 16
        %vm365 = vcmp.lt.s32.totalorder %v363, 16
        %v366 = vsel %vm364, %v355, 0.0
        %v367 = vsel %vm365, %v356, 0.0
        %v368 = vld [vmem:[#allocation2] sm:$0x1]
        %v369 = vadd.f32 %v366, %v367
        %v370 = vrot.slane %v369, 4
        %v371 = vadd.f32 %v369, %v370
        %v372 = vrot.slane %v371, 2
        %v373 = vadd.f32 %v371, %v372
        %v374 = vrot.slane %v373, 1
        %v375 = vadd.f32 %v373, %v374
        %v376 = vadd.f32 %v368, %v375
        %377 = vst [vmem:[#allocation2] sm:$0x1] %v376
        // Predicated region
        $region57: #{tpu_custom_call.1} parent=35 // pred_check
          %p378 = pneg %p324
        $region58: #{tpu_custom_call.1} parent=35 // pred_check_branch
          %380 = sbr.rel (%p378) target = $region60
        $region59: #{tpu_custom_call.1} parent=35 // pred_region
          %v381 = vld [vmem:[#allocation2] sm:$0x1]
          %vm382 = vcmask 1040384
          %v383 = vsel %vm382, %v381, 0.0
          %384 = vadd.xlane.f32.xlu0 %v383
          %v385 = vpop.xlane.xlu0 %384
          %v386 = vrot.slane %v385, 4
          %v387 = vadd.f32 %v385, %v386
          %v388 = vrot.slane %v387, 2
          %v389 = vadd.f32 %v387, %v388
          %v390 = vrot.slane %v389, 1
          %v391 = vadd.f32 %v389, %v390
          %s392 = vtos %v391
          %v393 = vld [vmem:[#allocation8] sm:$0x3]
          %v394 = vld [vmem:[#allocation8 + $0x2] sm:$0x3]
          %v395 = vadd.f32 %v394, 1.0
          %v396 = vmul.f32 %v393, %v393
          %v397 = vsub.f32 %v395, %v396
          %v398 = vmul.f32 %v394, 1.442695
          %v399 = vpow.pop %v398
          %v400 = vsub.f32 %v397, %v399
          %vm401 = vcmask 254976
          %v402 = vsel %vm401, %v400, 0.0
          %403 = vadd.xlane.f32.xlu0 %v402
          %v404 = vpop.xlane.xlu0 %403
          %v405 = vrot.slane %v404, 4
          %v406 = vadd.f32 %v404, %v405
          %v407 = vrot.slane %v406, 2
          %v408 = vadd.f32 %v406, %v407
          %v409 = vrot.slane %v408, 1
          %v410 = vadd.f32 %v408, %v409
          %s411 = vtos %v410
          %v412 = vrcp.pop 64.0
          %s413 = vtos %v412
          %s414 = smul.f32 %s411, %s413
          %s415 = smul.f32 %s414, -0.5
          %v416 = vld [vmem:[#allocation9] sm:$0xff]
          %v417 = vld [vmem:[#allocation9 + $0x8] sm:$0xff]
          %v418 = vld [vmem:[#allocation9 + $0x10] sm:$0xff]
          %v419 = vld [vmem:[#allocation9 + $0x18] sm:$0xff]
          %v420 = vld [vmem:[#allocation9 + $0x20] sm:$0xff]
          %v421 = vld [vmem:[#allocation9 + $0x28] sm:$0xff]
          %v422 = vmul.f32 %v417, 1.442695
          %v423 = vpow.pop %v422
          %v424 = vmul.f32 %v419, 1.442695
          %v425 = vpow.pop %v424
          %v426 = vmul.f32 %v421, 1.442695
          %v427 = vpow.pop %v426
          %v428 = vmul.f32 %v416, %v416
          %v429 = vmul.f32 %v418, %v418
          %v430 = vmul.f32 %v420, %v420
          %v431 = vmul.f32 %v425, %v425
          %v432 = vmul.f32 %v427, %v427
          %v433 = vadd.f32 %v429, %v425
          %v434 = vsub.f32 %v433, %v430
          %v435 = vsub.f32 %v434, %v427
          %v436 = vmul.f32 %v416, 2.0
          %v437 = vsub.f32 %v418, %v420
          %v438 = vmul.f32 %v436, %v437
          %v439 = vsub.f32 %v435, %v438
          %vm440 = vcmask 261120
          %v441 = vsel %vm440, %v439, 0.0
          %442 = vadd.xlane.f32.xlu0 %v441
          %v443 = vpop.xlane.xlu0 %442
          %v444 = vmul.f32 %v429, 2.0
          %v445 = vmul.f32 %v444, %v425
          %v446 = vadd.f32 %v431, %v445
          %v447 = vadd.f32 %v423, %v428
          %v448 = vmul.f32 %v447, 2.0
          %v449 = vmul.f32 %v448, %v433
          %v450 = vadd.f32 %v446, %v449
          %v451 = vmul.f32 %v428, 2.0
          %v452 = vmul.f32 %v451, %v429
          %v453 = vsub.f32 %v450, %v452
          %v454 = vmul.f32 %v416, 4.0
          %v455 = vmul.f32 %v454, %v418
          %v456 = vmul.f32 %v455, %v425
          %v457 = vsub.f32 %v453, %v456
          %v458 = vmul.f32 %v430, 2.0
          %v459 = vmul.f32 %v458, %v427
          %v460 = vadd.f32 %v432, %v459
          %v461 = vadd.f32 %v427, %v430
          %v462 = vmul.f32 %v448, %v461
          %v463 = vadd.f32 %v460, %v462
          %v464 = vmul.f32 %v451, %v430
          %v465 = vsub.f32 %v463, %v464
          %v466 = vmul.f32 %v454, %v420
          %v467 = vmul.f32 %v466, %v427
          %v468 = vsub.f32 %v465, %v467
          %v469 = vmul.f32 %v418, 4.0
          %v470 = vmul.f32 %v469, %v420
          %v471 = vmul.f32 %v470, %v423
          %v472 = vmul.f32 %v457, 2.0
          %v473 = vmul.f32 %v468, 2.0
          %v474 = vadd.f32 %v472, %v473
          %v475 = vmul.f32 %v471, 2.0
          %v476 = vsub.f32 %v474, %v475
          %v477 = vsel %vm440, %v476, 0.0
          %478 = vadd.xlane.f32.xlu0 %v477
          %v479 = vpop.xlane.xlu0 %478
          %v480 = vmax.f32 %v479, 0.0
          %v481 = vrsqrt.pop %v480
          %v482 = vmul.f32 %v480, %v481
          %vm483 = vcmp.eq.f32.partialorder %v480, inf
          %v484 = vsel %vm483, %v480, %v482
          %vm485 = vcmp.eq.f32.partialorder %v480, 0.0
          %v486 = vand.u32 %v480, 2147483648
          %v487 = vsel %vm485, %v486, %v484
          %v488 = vsub.f32 -1.0, %v443
          %v489 = vadd.f32 %v487, 1e-08
          %v490 = vrcp.pop %v489
          %v491 = vmul.f32 %v488, %v490
          %v492 = vmul.f32 %v491, 0.70710677
          %v493 = verf.f32.pop %v492
          %v494 = vadd.f32 %v493, 1.0
          %v495 = vmul.f32 %v494, 0.5
          %v496 = vadd.f32 %v495, 1e-08
          %v497 = vlog2.pop %v496
          %v498 = vmul.f32 %v497, 0.6931472
          %v499 = vsub.f32 0.0, %v498
          %vm500 = vcmask 7168
          %v501 = vsel %vm500, %v499, 0.0
          %502 = vadd.xlane.f32.xlu0 %v501
          %v503 = vpop.xlane.xlu0 %502
          %v504 = vrot.slane %v503, 4
          %v505 = vadd.f32 %v503, %v504
          %v506 = vrot.slane %v505, 2
          %v507 = vadd.f32 %v505, %v506
          %v508 = vrot.slane %v507, 1
          %v509 = vadd.f32 %v507, %v508
          %s510 = vtos %v509
          %v511 = vrcp.pop 8.0
          %s512 = vtos %v511
          %s513 = smul.f32 %s510, %s512
          %v514 = vsub.f32 %v416, %v418
          %v515 = vmul.f32 %v514, %v514
          %v516 = vsel %vm440, %v515, 0.0
          %517 = vadd.xlane.f32.xlu0 %v516
          %v518 = vpop.xlane.xlu0 %517
          %v519 = vsub.f32 %v416, %v420
          %v520 = vmul.f32 %v519, %v519
          %v521 = vsel %vm440, %v520, 0.0
          %522 = vadd.xlane.f32.xlu0 %v521
          %v523 = vpop.xlane.xlu0 %522
          %vm524 = vcmp.lt.f32.partialorder %v518, %v523
          %v525 = vsel %vm524, 1, 0
          %v526 = vcvt.s32.f32 %v525
          %v527 = vsel %vm500, %v526, 0.0
          %528 = vadd.xlane.f32.xlu0 %v527
          %v529 = vpop.xlane.xlu0 %528
          %v530 = vrot.slane %v529, 4
          %v531 = vadd.f32 %v529, %v530
          %v532 = vrot.slane %v531, 2
          %v533 = vadd.f32 %v531, %v532
          %v534 = vrot.slane %v533, 1
          %v535 = vadd.f32 %v533, %v534
          %s536 = vtos %v535
          %v537 = vrcp.pop 8.0
          %s538 = vtos %v537
          %s539 = smul.f32 %s536, %s538
          %vm540 = vcmp.eq.s32.totalorder %v359, 0
          %v541 = vstv %s392
          %v542 = vsel %vm540, %v541, 0.0
          %vm543 = vcmp.eq.s32.totalorder %v359, 1
          %v544 = vstv %s415
          %v545 = vsel %vm543, %v544, %v542
          %vm546 = vcmp.eq.s32.totalorder %v359, 2
          %v547 = vstv %s513
          %v548 = vsel %vm546, %v547, %v545
          %vm549 = vcmp.eq.s32.totalorder %v359, 3
          %v550 = vstv %s539
          %v551 = vsel %vm549, %v550, %v548
          %552 = vst [vmem:[%s314] sm:$0xff] %v551
        $region60: #{tpu_custom_call.1} parent=35 // pred_fallthru
          _
        %s553 = sand.u32 %s151, 1
        %s554 = scalar_lea.sflag [#allocation5], %s553
        %s555 = sand.u32 %s151, 1
        %s556 = smul.addr %s555, 8
        %s557 = scalar_lea.vmem [#allocation11], %s556
        // Predicated region
        $region61: #{tpu_custom_call.1} parent=35 // pred_check
          %p558 = pneg %p161
        $region62: #{tpu_custom_call.1} parent=35 // pred_check_branch
          %560 = sbr.rel (%p558) target = $region64
        $region63: #{tpu_custom_call.1} parent=35 // pred_region
          %s562 = ssub.s32 128, 128
          %563 = vsyncadd %s554, %s562
          %s564 = smul.addr %s29, 128
          %s565 = scalar_lea.hbm %s4, %s564
          %s567 = sshll.u32 %s557, 4
          %s568 = int_to_ptr.vmem [resolvable:$true] %s567
          %570 = dma.vmem_to_hbm [thread:$0]  %s568, 128, %s565, %s554
        $region64: #{tpu_custom_call.1} parent=35 // pred_fallthru
          _
      $region36: #{tpu_custom_call.1} parent=5 // pred_fallthru
        _
      %p571 = scmp.le.s32.totalorder 2, %s20
      // Predicated region
      $region65: #{tpu_custom_call.1} parent=5 // pred_check
        %p572 = pneg %p571
      $region66: #{tpu_custom_call.1} parent=5 // pred_check_branch
        %574 = sbr.rel (%p572) target = $region68
      $region67: #{tpu_custom_call.1} parent=5 // pred_region
        %s575 = ssub.s32 %s20, 2
        // Predicated region
        $region69: #{tpu_custom_call.1} parent=67 // pred_check
          %p576 = pneg %p167
        $region70: #{tpu_custom_call.1} parent=67 // pred_check_branch
          %578 = sbr.rel (%p576) target = $region72
        $region71: #{tpu_custom_call.1} parent=67 // pred_region
          %s579 = sand.u32 %s152, 1
          %s580 = scalar_lea.sflag [#allocation5], %s579
          %s581 = sand.u32 %s152, 1
          %s582 = smul.addr %s581, 8
          %s583 = scalar_lea.vmem [#allocation11], %s582
          %584 = dma.done %s580, 128
        $region72: #{tpu_custom_call.1} parent=67 // pred_fallthru
          _
      $region68: #{tpu_custom_call.1} parent=5 // pred_fallthru
        _
    $region6: #{tpu_custom_call.1} parent=1 // loop_footer
      %s24 = sadd.s32 1, %s20
    $region7: #{tpu_custom_call.1} parent=1 // loop_footer_branch
      %19 = sbr.rel target = $region3
    $region8: #{tpu_custom_call.1} parent=1 // loop_exit
      _
    %585 = vsyncpa [#allocation4], 1
    %s586 = scalar_lea.sflag [#allocation4], 1
    %587 = vsyncpa %s586, 1
    %588 = vsyncpa [#allocation7], 1
    %s589 = scalar_lea.sflag [#allocation7], 1
    %590 = vsyncpa %s589, 1
    %591 = vsyncpa [#allocation10], 1
    %592 = vsyncpa [#allocation5], 1
    %s593 = scalar_lea.sflag [#allocation5], 1
    %594 = vsyncpa %s593, 1

</llo_original>
